<compile_context>
chip_gen: v7x
topology: tpu7x:2x2x1
jax: 0.10.0
libtpu: 0.0.40
codegen_flags: <defaults>
</compile_context>

<pallas_src>
import functools

import jax
import jax.numpy as jnp
from jax.experimental import pallas as pl
from jax.experimental.pallas import tpu as pltpu

LRELU_SLOPE = 0.1
MAX_T_TILE = 512                # output-time lanes per tile (multiple of 128 when tiled)
GROUP_BUDGET_BYTES = 6 << 20    # cap on the patches block per grid step
MAX_GROUPS_PER_STEP = 32        # cap on the in-kernel group unroll

# (cin, cout, kernel, stride, groups, padding) — straight from DiscriminatorS.__init__
LAYER_CFGS = [
    (1, 16, 15, 1, 1, 7),
    (16, 64, 41, 4, 4, 20),
    (64, 256, 41, 4, 16, 20),
    (256, 1024, 41, 4, 64, 20),
    (1024, 1024, 41, 4, 256, 20),
    (1024, 1024, 5, 1, 1, 2),
]
POST_CFG = (1024, 1, 3, 1, 1, 1)


def _grouped_conv_kernel(p_ref, w_ref, b_ref, o_ref, *, gt, cog, ckp, slope):
    """One grid cell: `gt` independent matmuls W_g @ P_g with fused bias / leaky-relu.

    p_ref: (1, gt*ckp, T_tile)  packed im2col patches (compute dtype)
    w_ref: (gt*cog, ckp)        weights, channel-major (compute dtype)
    b_ref: (gt*cog, 1)          bias (f32)
    o_ref: (1, gt*cog, T_tile)  output (f32); time is the lane dim -> dense stores
    """
    for g in range(gt):  # static unroll; gt <= MAX_GROUPS_PER_STEP
        w = w_ref[g * cog:(g + 1) * cog, :]            # (cog, ckp)
        p = p_ref[0, g * ckp:(g + 1) * ckp, :]          # (ckp, T_tile)
        acc = jnp.dot(w, p, preferred_element_type=jnp.float32)
        acc = acc + b_ref[g * cog:(g + 1) * cog, :]     # (cog, 1) broadcasts over T
        if slope is not None:
            acc = jnp.where(acc >= 0, acc, acc * slope)
        o_ref[0, g * cog:(g + 1) * cog, :] = acc.astype(o_ref.dtype)


def _pad_kernel_taps(cin_g, k):
    """Smallest k' >= k with (cin_g * k') % 8 == 0 (sublane-aligned per-group CK)."""
    kp = k
    while (cin_g * kp) % 8 != 0:
        kp += 1
    return kp


def _pick_group_tile(groups, cout_g, ckp, t_tile, itemsize):
    """Largest group-fusion factor that keeps blocks aligned and within VMEM budget."""
    valid = [gt for gt in range(1, groups + 1)
             if groups % gt == 0 and (gt == groups or (gt * cout_g) % 8 == 0)]
    fitting = [gt for gt in valid
               if gt <= MAX_GROUPS_PER_STEP
               and gt * ckp * t_tile * itemsize <= GROUP_BUDGET_BYTES]
    return max(fitting) if fitting else min(valid)


def _im2col(x, k_pad, stride, pad, t_total):
    """x: (B, Cin, L) -> patches (B, Cin, k_pad, t_total); p[b,c,k,t] = xpad[b,c,t*stride+k].

    Indices are clamped in-bounds; the extra (padded) taps are multiplied by
    zero weights and the extra time positions are sliced off after the kernel.
    """
    B, Cin, L = x.shape
    xp = jnp.pad(x, ((0, 0), (0, 0), (pad, pad)))
    lp = L + 2 * pad
    idx = jnp.arange(k_pad)[:, None] + stride * jnp.arange(t_total)[None, :]
    idx = jnp.minimum(idx, lp - 1)
    return xp[:, :, idx]


def conv1d_pallas(x, w, b, *, stride, pad, groups, slope=None,
                  compute_dtype=jnp.bfloat16):
    """Grouped Conv1d + bias (+ optional fused leaky-relu). Matmul runs in Pallas."""
    B, Cin, L = x.shape
    Cout, Cin_g, K = w.shape
    G = groups
    assert Cin == Cin_g * G and Cout % G == 0
    Cout_g = Cout // G

    K_pad = _pad_kernel_taps(Cin_g, K)
    CKp = Cin_g * K_pad
    T_out = (L + 2 * pad - K) // stride + 1
    assert T_out >= 1

    # Time tiling: lane dim is a multiple of 128 when tiled, full-extent otherwise.
    if T_out > MAX_T_TILE:
        t_tile = MAX_T_TILE
        t_total = pl.cdiv(T_out, t_tile) * t_tile
    else:
        t_tile = T_out
        t_total = T_out
    n_t = t_total // t_tile

    itemsize = jnp.dtype(compute_dtype).itemsize

    # Channel blocking: fuse several groups per grid step for the grouped layers;
    # tile Cout (multiple of 128) for the dense (groups=1) layers.
    if G > 1:
        gt = _pick_group_tile(G, Cout_g, CKp, t_tile, itemsize)
        n_ch = G // gt
        ch_tile = gt * Cout_g
        cog = Cout_g
        p_rows = gt * CKp
        p_index = lambda cib, bi, ti: (bi, cib, ti)
    else:
        gt = 1
        ch_tile = Cout if Cout <= 256 else 256
        assert Cout % ch_tile == 0
        n_ch = Cout // ch_tile
        cog = ch_tile
        p_rows = CKp
        p_index = lambda cib, bi, ti: (bi, 0, ti)

    # bf16 (or f32) MXU operands; f32 bias / output.
    xc = x.astype(compute_dtype)
    if K_pad > K:
        w = jnp.pad(w, ((0, 0), (0, 0), (0, K_pad - K)))   # zero taps -> zero contribution
    wc = w.reshape(Cout, CKp).astype(compute_dtype)
    bc = b.astype(jnp.float32).reshape(Cout, 1)

    # TODO(synk): patch construction still happens at the wrapper level (K-fold HBM
    # blow-up for the K=41 layers); building patches in-kernel from an overlapping
    # raw-input window (memory_space=pl.ANY + make_async_copy) would cut activation
    # HBM traffic further.
    patches = _im2col(xc, K_pad, stride, pad, t_total)       # (B, Cin, K_pad, t_total)
    patches = patches.reshape(B, G * CKp, t_total)           # pure view, no transpose

    kernel = functools.partial(_grouped_conv_kernel, gt=gt, cog=cog, ckp=CKp,
                               slope=slope)

    out = pl.pallas_call(
        kernel,
        out_shape=jax.ShapeDtypeStruct((B, Cout, t_total), jnp.float32),
        grid=(n_ch, B, n_t),  # channel-block outermost -> weight tile stays resident
        in_specs=[
            pl.BlockSpec((1, p_rows, t_tile), p_index),
            pl.BlockSpec((ch_tile, CKp), lambda cib, bi, ti: (cib, 0)),
            pl.BlockSpec((ch_tile, 1), lambda cib, bi, ti: (cib, 0)),
        ],
        out_specs=pl.BlockSpec((1, ch_tile, t_tile),
                               lambda cib, bi, ti: (bi, cib, ti)),
        compiler_params=pltpu.CompilerParams(
            dimension_semantics=("parallel", "parallel", "parallel"),
            vmem_limit_bytes=48 * 1024 * 1024),   # safe on v7x's 64 MiB VMEM
    )(patches, wc, bc)

    if t_total != T_out:
        out = out[:, :, :T_out]
    return out


def init_params(key):
    # TODO(synk): weight_norm / spectral_norm are reparameterizations of the stored
    # weight; the forward pass uses the effective weight directly.
    params = []
    for (cin, cout, k, s, g, p) in LAYER_CFGS + [POST_CFG]:
        key, wk, bk = jax.random.split(key, 3)
        w = jax.random.normal(wk, (cout, cin // g, k), jnp.float32) * 0.02
        bias = jax.random.normal(bk, (cout,), jnp.float32) * 0.01
        params.append((w, bias))
    return params


def discriminator_s_forward(x, params, compute_dtype=jnp.bfloat16):
    """x: (B, 1, T) float32 -> (x_flat, fmap), mirroring the PyTorch module."""
    fmap = []
    for (w, b), (_, _, k, s, g, p) in zip(params[:-1], LAYER_CFGS):
        x = conv1d_pallas(x, w, b, stride=s, pad=p, groups=g,
                          slope=LRELU_SLOPE, compute_dtype=compute_dtype)
        fmap.append(x)
    w, b = params[-1]
    _, _, k, s, g, p = POST_CFG
    x = conv1d_pallas(x, w, b, stride=s, pad=p, groups=g,
                      slope=None, compute_dtype=compute_dtype)
    fmap.append(x)
    x_flat = x.reshape(x.shape[0], -1)
    return x_flat, fmap


def _ref_forward(x, params, compute_dtype=jnp.float32):
    """Pure-JAX reference (lax conv) at matching operand precision."""
    def conv(x, w, b, s, p, g):
        y = jax.lax.conv_general_dilated(
            x.astype(compute_dtype), w.astype(compute_dtype),
            window_strides=(s,), padding=[(p, p)],
            dimension_numbers=("NCH", "OIH", "NCH"),
            feature_group_count=g,
            preferred_element_type=jnp.float32,
            precision=jax.lax.Precision.HIGHEST)
        return y + b[None, :, None].astype(jnp.float32)

    for (w, b), (_, _, k, s, g, p) in zip(params[:-1], LAYER_CFGS):
        x = conv(x, w, b, s, p, g)
        x = jnp.where(x >= 0, x, x * LRELU_SLOPE)
    w, b = params[-1]
    _, _, k, s, g, p = POST_CFG
    x = conv(x, w, b, s, p, g)
    return x.reshape(x.shape[0], -1)


if __name__ == "__main__":
    key = jax.random.PRNGKey(0)
    pkey, xkey = jax.random.split(key)
    params = init_params(pkey)

    # Small input consistent with the module: (batch=2, channels=1, seq=256).
    x = jax.random.normal(xkey, (2, 1, 256), jnp.float32)

    # 1) f32 operand path vs. f32 reference (tight correctness check).
    out32, fmap32 = discriminator_s_forward(x, params, compute_dtype=jnp.float32)
    out32 = jax.block_until_ready(out32)
    for f in fmap32:
        jax.block_until_ready(f)
    ref32 = jax.block_until_ready(_ref_forward(x, params, compute_dtype=jnp.float32))
    assert out32.shape == ref32.shape == (2, 1)
    assert len(fmap32) == 7
    assert jnp.allclose(out32, ref32, rtol=2e-3, atol=2e-3)

    # 2) Optimized bf16-MXU path vs. a bf16-operand / f32-accumulate reference.
    out16, fmap16 = discriminator_s_forward(x, params, compute_dtype=jnp.bfloat16)
    out16 = jax.block_until_ready(out16)
    for f in fmap16:
        jax.block_until_ready(f)
    ref16 = jax.block_until_ready(_ref_forward(x, params, compute_dtype=jnp.bfloat16))
    assert out16.shape == (2, 1) and len(fmap16) == 7
    assert jnp.allclose(out16, ref16, rtol=2e-3, atol=2e-3)

    print("KERNEL_OK")
</pallas_src>

<mosaic_0001>
module attributes {stable_mosaic.version = 11 : i64} {
  func.func @_grouped_conv_kernel(%arg0: i32, %arg1: i32, %arg2: i32, %arg3: memref<1x16x256xf32, #tpu.memory_space<vmem>>, %arg4: memref<16x16xf32, #tpu.memory_space<vmem>>, %arg5: memref<16x1xf32, #tpu.memory_space<vmem>>, %arg6: memref<1x16x256xf32, #tpu.memory_space<vmem>>) attributes {dimension_semantics = [#tpu.dimension_semantics<parallel>, #tpu.dimension_semantics<parallel>, #tpu.dimension_semantics<parallel>], iteration_bounds = array<i64: 1, 2, 1>, scalar_prefetch = 0 : i64, scratch_operands = 0 : i64, tpu.core_type = #tpu.core_type<tc>, window_params = [{transform_indices = @transform_0, window_bounds = array<i64: 1, 16, 256>}, {transform_indices = @transform_1, window_bounds = array<i64: 16, 16>}, {transform_indices = @transform_2, window_bounds = array<i64: 16, 1>}, {transform_indices = @transform_3, window_bounds = array<i64: 1, 16, 256>}]} {
    %c0 = arith.constant 0 : index
    %c0_0 = arith.constant 0 : index
    %0 = vector.load %arg4[%c0, %c0_0] : memref<16x16xf32, #tpu.memory_space<vmem>>, vector<16x16xf32>
    %c0_1 = arith.constant 0 : index
    %c0_2 = arith.constant 0 : index
    %c0_3 = arith.constant 0 : index
    %1 = vector.load %arg3[%c0_1, %c0_2, %c0_3] : memref<1x16x256xf32, #tpu.memory_space<vmem>>, vector<1x16x256xf32>
    %2 = vector.shape_cast %1 : vector<1x16x256xf32> to vector<16x256xf32>
    %cst = arith.constant dense<0.000000e+00> : vector<16x256xf32>
    %3 = tpu.matmul %0, %2, %cst {dimension_numbers = #tpu.dot_dimension_numbers<[1], [0], [0], [1], [0, 0, 1, 1], [], []>} : vector<16x16xf32>, vector<16x256xf32>, vector<16x256xf32> -> vector<16x256xf32>
    %c0_4 = arith.constant 0 : index
    %c0_5 = arith.constant 0 : index
    %4 = vector.load %arg5[%c0_4, %c0_5] : memref<16x1xf32, #tpu.memory_space<vmem>>, vector<16x1xf32>
    %5 = vector.broadcast %4 : vector<16x1xf32> to vector<16x256xf32>
    %6 = arith.addf %3, %5 : vector<16x256xf32>
    %cst_6 = arith.constant 0.000000e+00 : f32
    %7 = vector.broadcast %cst_6 : f32 to vector<16x256xf32>
    %8 = arith.cmpf oge, %6, %7 : vector<16x256xf32>
    %cst_7 = arith.constant 1.000000e-01 : f32
    %9 = vector.broadcast %cst_7 : f32 to vector<16x256xf32>
    %10 = arith.mulf %6, %9 : vector<16x256xf32>
    %11 = arith.select %8, %6, %10 : vector<16x256xi1>, vector<16x256xf32>
    %c0_8 = arith.constant 0 : index
    %c0_9 = arith.constant 0 : index
    %c0_10 = arith.constant 0 : index
    %12 = vector.load %arg6[%c0_8, %c0_9, %c0_10] : memref<1x16x256xf32, #tpu.memory_space<vmem>>, vector<1x16x256xf32>
    %13 = vector.shape_cast %12 : vector<1x16x256xf32> to vector<16x256xf32>
    %14 = vector.shape_cast %11 : vector<16x256xf32> to vector<1x16x256xf32>
    tpu.vector_store %arg6[%c0_8, %c0_9, %c0_10], %14 {strides = array<i32>} : memref<1x16x256xf32, #tpu.memory_space<vmem>>, vector<1x16x256xf32>,
    return
  }
  func.func @transform_0(%arg0: i32, %arg1: i32, %arg2: i32) -> (i32, i32, i32) {
    %c0_i32 = arith.constant 0 : i32
    %c0_i32_0 = arith.constant 0 : i32
    return %arg1, %c0_i32, %arg2 : i32, i32, i32
  }
  func.func @transform_1(%arg0: i32, %arg1: i32, %arg2: i32) -> (i32, i32) {
    %c0_i32 = arith.constant 0 : i32
    %c0_i32_0 = arith.constant 0 : i32
    return %arg0, %c0_i32 : i32, i32
  }
  func.func @transform_2(%arg0: i32, %arg1: i32, %arg2: i32) -> (i32, i32) {
    %c0_i32 = arith.constant 0 : i32
    %c0_i32_0 = arith.constant 0 : i32
    return %arg0, %c0_i32 : i32, i32
  }
  func.func @transform_3(%arg0: i32, %arg1: i32, %arg2: i32) -> (i32, i32, i32) {
    %c0_i32 = arith.constant 0 : i32
    return %arg1, %arg0, %arg2 : i32, i32, i32
  }
}

</mosaic_0001>

<llo_original>
// kernel: tpu_custom_call.1
$region0: #{tpu_custom_call.1}
  #allocation0 [shape = 'u32[]', space=smem, size = 0x4, offset = 0x4, fixed_abs, tag = 'smem constant byte address 0x4 - core index']
  #allocation1 [shape = 'u32[144,128]{1,0:T(1,128)}', space=vmem, size = 0x12000, scoped, tag = 'internal scratch']
  %s0 = inlined_call_operand.hbm [shape: f32[2,16,256], index: 0, kind: input, shape index: {}]
  %s1 = inlined_call_operand.vmem [shape: f32[16,16], index: 1, kind: input, shape index: {}]
  %s2 = inlined_call_operand.vmem [shape: f32[16,1], index: 2, kind: input, shape index: {}]
  %s3 = inlined_call_operand.hbm [shape: f32[2,16,256], index: 3, kind: output, shape index: {}]
  %s4 = sld [smem:[#allocation0]]
  $region49: #{tpu_custom_call.1} parent=0
    _
  %s6 = ssub.s32 1, %s4
  %s7 = scalar_select 0, %s6, %s4
  $region1: #{tpu_custom_call.1} parent=0
    #allocation2 [shape = 'u8[32768]{0}', space=vmem, size = 0x8000, scoped, tag = 'input window, operand 0']
    #allocation3 [shape = 's32[2]{0}', space=sflag, size = 0x8, scoped, tag = 'scoped memory for tpu_custom_call.1']
    #allocation4 [shape = 's32[2]{0}', space=sflag, size = 0x8, scoped, tag = 'scoped memory for tpu_custom_call.1']
    #allocation5 [shape = 'u8[32768]{0}', space=vmem, size = 0x8000, scoped, tag = 'output window, operand 0']
    %8 = vsyncpa [#allocation3], 0
    %s9 = scalar_lea.sflag [#allocation3], 1
    %10 = vsyncpa %s9, 0
    %11 = vsyncpa [#allocation4], 0
    %s12 = scalar_lea.sflag [#allocation4], 1
    %13 = vsyncpa %s12, 0
    loop: start=0, step=1, limit=4
    $region2: #{tpu_custom_call.1} parent=1 // loop_pre_header
      _
    $region3: #{tpu_custom_call.1} parent=1 // loop_header
      %s15 = sphi 0, %s19
      %p16 = scmp.ge.s32.totalorder %s15, 4
      %s22 = sphi 0, %s41
      %s23 = sphi 0, %s37
      %s24 = sphi 0, %s33
      %s25 = sphi 0, %s22
      %s26 = sphi 0, %s23
      %s27 = sphi 0, %s24
      %s28 = sphi 0, %s25
      %s29 = sphi 0, %s26
      %s30 = sphi 0, %s27
      %s46 = sphi 0, %s48
      %s49 = sphi 0, %s46
      %s50 = sphi 0, %s49
      %s66 = sphi 0, %s50
      %s72 = sphi 0, %s74
      %s75 = sphi 0, %s72
      %s76 = sphi 0, %s75
      %s92 = sphi 0, %s76
      %s98 = sphi 0, %s100
      %s101 = sphi 0, %s98
      %s102 = sphi 0, %s101
      %s118 = sphi 0, %s102
      %s128 = sphi 0, %s130
      %s131 = sphi 0, %s128
      %s132 = sphi 0, %s131
      %s148 = sphi 0, %s132
    $region4: #{tpu_custom_call.1} parent=1 // loop_header_branch
      %18 = sbr.rel (%p16) target = $region8
    $region5: #{tpu_custom_call.1} parent=1 // loop_body
      %s20 = ssub.s32 %s15, 1
      %s21 = ssub.s32 %s15, 2
      %s31 = sadd.s32 1, %s24
      %p32 = scmp.ge.s32.totalorder %s31, 1
      %s33 = scalar_select %p32, 0, %s31
      %s34 = sadd.s32 1, %s23
      %s35 = scalar_select %p32, %s34, %s23
      %p36 = scmp.ge.s32.totalorder %s35, 2
      %s37 = scalar_select %p36, 0, %s35
      %s38 = sadd.s32 1, %s22
      %s39 = scalar_select %p36, %s38, %s22
      %p40 = scmp.ge.s32.totalorder %s39, 1
      %s41 = scalar_select %p40, 0, %s39
      %s42 = ssub.s32 %s23, %s37
      %s43 = ssub.s32 %s24, %s33
      %s44 = sor.u32 %s42, %s43
      %p45 = scmp.eq.s32.totalorder %s44, 0
      %s47 = sadd.s32 %s46, 1
      %s48 = scalar_select %p45, %s46, %s47
      %p51 = pneg %p45
      %p52 = scmp.eq.s32.totalorder %s15, 1
      %p53 = por %p51, %p52
      %p54 = scmp.ne.s32.totalorder %s46, %s49
      %p55 = scmp.eq.s32.totalorder %s15, 0
      %p56 = por %p54, %p55
      %p57 = scmp.ne.s32.totalorder %s46, %s49
      %p58 = scmp.eq.s32.totalorder %s20, 1
      %p59 = por %p57, %p58
      %p60 = scmp.ne.s32.totalorder %s49, %s50
      %p61 = scmp.eq.s32.totalorder %s20, 0
      %p62 = por %p60, %p61
      %p63 = scmp.ne.s32.totalorder %s49, %s50
      %p64 = scmp.eq.s32.totalorder %s21, 1
      %p65 = por %p63, %p64
      %p67 = scmp.ne.s32.totalorder %s50, %s66
      %p68 = scmp.eq.s32.totalorder %s21, 0
      %p69 = por %p67, %p68
      %s70 = ssub.s32 %s22, %s41
      %p71 = scmp.eq.s32.totalorder %s70, 0
      %s73 = sadd.s32 %s72, 1
      %s74 = scalar_select %p71, %s72, %s73
      %p77 = pneg %p71
      %p78 = scmp.eq.s32.totalorder %s15, 1
      %p79 = por %p77, %p78
      %p80 = scmp.ne.s32.totalorder %s72, %s75
      %p81 = scmp.eq.s32.totalorder %s15, 0
      %p82 = por %p80, %p81
      %p83 = scmp.ne.s32.totalorder %s72, %s75
      %p84 = scmp.eq.s32.totalorder %s20, 1
      %p85 = por %p83, %p84
      %p86 = scmp.ne.s32.totalorder %s75, %s76
      %p87 = scmp.eq.s32.totalorder %s20, 0
      %p88 = por %p86, %p87
      %p89 = scmp.ne.s32.totalorder %s75, %s76
      %p90 = scmp.eq.s32.totalorder %s21, 1
      %p91 = por %p89, %p90
      %p93 = scmp.ne.s32.totalorder %s76, %s92
      %p94 = scmp.eq.s32.totalorder %s21, 0
      %p95 = por %p93, %p94
      %s96 = ssub.s32 %s22, %s41
      %p97 = scmp.eq.s32.totalorder %s96, 0
      %s99 = sadd.s32 %s98, 1
      %s100 = scalar_select %p97, %s98, %s99
      %p103 = pneg %p97
      %p104 = scmp.eq.s32.totalorder %s15, 1
      %p105 = por %p103, %p104
      %p106 = scmp.ne.s32.totalorder %s98, %s101
      %p107 = scmp.eq.s32.totalorder %s15, 0
      %p108 = por %p106, %p107
      %p109 = scmp.ne.s32.totalorder %s98, %s101
      %p110 = scmp.eq.s32.totalorder %s20, 1
      %p111 = por %p109, %p110
      %p112 = scmp.ne.s32.totalorder %s101, %s102
      %p113 = scmp.eq.s32.totalorder %s20, 0
      %p114 = por %p112, %p113
      %p115 = scmp.ne.s32.totalorder %s101, %s102
      %p116 = scmp.eq.s32.totalorder %s21, 1
      %p117 = por %p115, %p116
      %p119 = scmp.ne.s32.totalorder %s102, %s118
      %p120 = scmp.eq.s32.totalorder %s21, 0
      %p121 = por %p119, %p120
      %s122 = ssub.s32 %s23, %s37
      %s123 = ssub.s32 %s22, %s41
      %s124 = sor.u32 %s122, %s123
      %s125 = ssub.s32 %s24, %s33
      %s126 = sor.u32 %s124, %s125
      %p127 = scmp.eq.s32.totalorder %s126, 0
      %s129 = sadd.s32 %s128, 1
      %s130 = scalar_select %p127, %s128, %s129
      %p133 = pneg %p127
      %p134 = scmp.eq.s32.totalorder %s15, 1
      %p135 = por %p133, %p134
      %p136 = scmp.ne.s32.totalorder %s128, %s131
      %p137 = scmp.eq.s32.totalorder %s15, 0
      %p138 = por %p136, %p137
      %p139 = scmp.ne.s32.totalorder %s128, %s131
      %p140 = scmp.eq.s32.totalorder %s20, 1
      %p141 = por %p139, %p140
      %p142 = scmp.ne.s32.totalorder %s131, %s132
      %p143 = scmp.eq.s32.totalorder %s20, 0
      %p144 = por %p142, %p143
      %p145 = scmp.ne.s32.totalorder %s131, %s132
      %p146 = scmp.eq.s32.totalorder %s21, 1
      %p147 = por %p145, %p146
      %p149 = scmp.ne.s32.totalorder %s132, %s148
      %p150 = scmp.eq.s32.totalorder %s21, 0
      %p151 = por %p149, %p150
      %p152 = scmp.le.s32.totalorder 1, %s15
      %p153 = scmp.lt.s32.totalorder %s15, 3
      %p154 = pnand %p152, %p153
      %p155 = pneg %p154
      // Predicated region
      $region9: #{tpu_custom_call.1} parent=5 // pred_check
        _
      $region10: #{tpu_custom_call.1} parent=5 // pred_check_branch
        %157 = sbr.rel (%p154) target = $region12
      $region11: #{tpu_custom_call.1} parent=5 // pred_region
        %s158 = ssub.s32 %s15, 1
        // Predicated region
        $region13: #{tpu_custom_call.1} parent=11 // pred_check
          %p159 = pneg %p88
        $region14: #{tpu_custom_call.1} parent=11 // pred_check_branch
          %161 = sbr.rel (%p159) target = $region16
        $region15: #{tpu_custom_call.1} parent=11 // pred_region
          %s162 = smul.u32 2, %s25
          %p163 = scmp.lt.s32.totalorder %s162, 1
          %s164 = scalar_select %p163, %s162, 1
          %s165 = smul.addr %s164, 8
          %s166 = scalar_lea.vmem %s1, %s165
          %s167 = smul.u32 2, %s25
        $region16: #{tpu_custom_call.1} parent=11 // pred_fallthru
          _
        // Predicated region
        $region17: #{tpu_custom_call.1} parent=11 // pred_check
          %p168 = pneg %p114
        $region18: #{tpu_custom_call.1} parent=11 // pred_check_branch
          %170 = sbr.rel (%p168) target = $region20
        $region19: #{tpu_custom_call.1} parent=11 // pred_region
          %s171 = smul.u32 2, %s25
          %p172 = scmp.lt.s32.totalorder %s171, 1
          %s173 = scalar_select %p172, %s171, 1
          %s174 = smul.addr %s173, 8
          %s175 = scalar_lea.vmem %s2, %s174
          %s176 = smul.u32 2, %s25
        $region20: #{tpu_custom_call.1} parent=11 // pred_fallthru
          _
      $region12: #{tpu_custom_call.1} parent=5 // pred_fallthru
        _
      %p177 = scmp.lt.s32.totalorder %s15, 2
      // Predicated region
      $region21: #{tpu_custom_call.1} parent=5 // pred_check
        %p178 = pneg %p177
      $region22: #{tpu_custom_call.1} parent=5 // pred_check_branch
        %180 = sbr.rel (%p178) target = $region24
      $region23: #{tpu_custom_call.1} parent=5 // pred_region
        // Predicated region
        $region25: #{tpu_custom_call.1} parent=23 // pred_check
          %p181 = pneg %p56
        $region26: #{tpu_custom_call.1} parent=23 // pred_check_branch
          %183 = sbr.rel (%p181) target = $region28
        $region27: #{tpu_custom_call.1} parent=23 // pred_region
          %s184 = sand.u32 %s46, 1
          %s185 = scalar_lea.sflag [#allocation3], %s184
          %s186 = sand.u32 %s46, 1
          %s187 = smul.addr %s186, 32
          %s188 = scalar_lea.vmem [#allocation2], %s187
          %s189 = smul.u32 2, %s24
          %s191 = ssub.s32 512, 512
          %192 = vsyncadd %s185, %s191
          %s193 = smul.addr %s23, 4
          %s194 = sadd.s32 %s189, %s193
          %s195 = smul.addr %s194, 128
          %s196 = scalar_lea.hbm %s0, %s195
          %s197 = sshll.u32 %s188, 4
          %s198 = int_to_ptr.vmem [resolvable:$true] %s197
          %203 = dma.hbm_to_vmem [thread:$0]  %s196, 512, %s198, %s185, 256, 256, 16
        $region28: #{tpu_custom_call.1} parent=23 // pred_fallthru
          _
      $region24: #{tpu_custom_call.1} parent=5 // pred_fallthru
        _
      %p204 = scmp.le.s32.totalorder 1, %s15
      %p205 = scmp.lt.s32.totalorder %s15, 3
      %p206 = pnand %p204, %p205
      %p207 = pneg %p206
      // Predicated region
      $region29: #{tpu_custom_call.1} parent=5 // pred_check
        _
      $region30: #{tpu_custom_call.1} parent=5 // pred_check_branch
        %209 = sbr.rel (%p206) target = $region32
      $region31: #{tpu_custom_call.1} parent=5 // pred_region
        %s210 = ssub.s32 %s15, 1
        %s211 = sand.u32 %s49, 1
        %s212 = scalar_lea.sflag [#allocation3], %s211
        %s213 = sand.u32 %s49, 1
        %s214 = smul.addr %s213, 32
        %s215 = scalar_lea.vmem [#allocation2], %s214
        // Predicated region
        $region33: #{tpu_custom_call.1} parent=31 // pred_check
          %p216 = pneg %p62
        $region34: #{tpu_custom_call.1} parent=31 // pred_check_branch
          %218 = sbr.rel (%p216) target = $region36
        $region35: #{tpu_custom_call.1} parent=31 // pred_region
          %219 = dma.done %s212, 512
        $region36: #{tpu_custom_call.1} parent=31 // pred_fallthru
          _
        %s220 = sand.u32 %s49, 1
        %s221 = scalar_lea.sflag [#allocation3], %s220
        %s222 = sand.u32 %s49, 1
        %s223 = smul.addr %s222, 32
        %s224 = scalar_lea.vmem [#allocation2], %s223
        %p225 = pneg %p62
        %p226 = pneg %p59
        %s227 = smul.u32 2, %s25
        %p228 = scmp.lt.s32.totalorder %s227, 1
        %s229 = scalar_select %p228, %s227, 1
        %s230 = smul.addr %s229, 8
        %s231 = scalar_lea.vmem %s1, %s230
        %p232 = pneg %p88
        %p233 = pneg %p85
        %s234 = smul.u32 2, %s25
        %p235 = scmp.lt.s32.totalorder %s234, 1
        %s236 = scalar_select %p235, %s234, 1
        %s237 = smul.addr %s236, 8
        %s238 = scalar_lea.vmem %s2, %s237
        %p239 = pneg %p114
        %p240 = pneg %p111
        %p241 = pneg %p144
        %p242 = pneg %p141
        %s243 = sand.u32 %s131, 1
        %s244 = scalar_lea.sflag [#allocation4], %s243
        %s245 = sand.u32 %s131, 1
        %s246 = smul.addr %s245, 32
        %s247 = scalar_lea.vmem [#allocation5], %s246
        %s248 = smul.u32 2, %s27
        %s249 = smul.u32 2, %s25
        %p250 = scmp.lt.s32.totalorder %s249, 1
        %s251 = scalar_select %p250, %s249, 1
        %s252 = smul.addr %s251, 8
        %s253 = scalar_lea.vmem %s1, %s252
        %s254 = smul.u32 2, %s25
        %s255 = smul.u32 2, %s25
        %p256 = scmp.lt.s32.totalorder %s255, 1
        %s257 = scalar_select %p256, %s255, 1
        %s258 = smul.addr %s257, 8
        %s259 = scalar_lea.vmem %s2, %s258
        %s260 = smul.u32 2, %s25
        %s261 = smul.u32 2, %s25
        %s262 = smul.u32 2, %s27
        %v263 = vld [vmem:[%s253] sm:$0xff]
        %v264 = vld [vmem:[%s253 + $0x8] sm:$0xff]
        %v265 = vld [vmem:[%s215] sm:$0xff]
        %v266 = vld [vmem:[%s215 + $0x8] sm:$0xff]
        %v267 = vld [vmem:[%s215 + $0x10] sm:$0xff]
        %v268 = vld [vmem:[%s215 + $0x18] sm:$0xff]
        %v269 = vld [vmem:[%s259] sm:$0xff]
        %v270 = vld [vmem:[%s259 + $0x8] sm:$0xff]
        %272 = vset.pattern.permute.xlu0 0
        %273 = vperm.xlu0 %272, %v269
        %v274 = vpop.permute.xlu0 %273
        %277 = vset.pattern.permute.xlu0 0
        %278 = vperm.xlu0 %277, %v270
        %v279 = vpop.permute.xlu0 %278
        %vm281 = vcmask 130048
        %v283 = vsel %vm281, %v263, 0
        %v286 = vsel %vm281, %v264, 0
        %288 = vmatprep.subr.mxu0 %v266
        %289 = vmatpush1.msra.mxu0 %v265
        %290 = vmatprep.subr.mxu0 %v268
        %291 = vmatpush1.msra.mxu0 %v267
        %292 = vmatprep.subr.mxu0 0.0
        %293 = vmatpush1.msra.mxu0 0.0
        %294 = vmatprep.subr.mxu0 0.0
        %295 = vmatpush1.msra.mxu0 0.0
        %296 = vmatprep.subr.mxu0 0.0
        %297 = vmatpush1.msra.mxu0 0.0
        %298 = vmatprep.subr.mxu0 0.0
        %299 = vmatpush1.msra.mxu0 0.0
        %300 = vmatprep.subr.mxu0 0.0
        %301 = vmatpush1.msra.mxu0 0.0
        %302 = vmatprep.subr.mxu0 0.0
        %303 = vmatpush1.msra.mxu0 0.0
        %304 = vmatprep.subr.mxu0 0.0
        %305 = vmatpush1.msra.mxu0 0.0
        %306 = vmatprep.subr.mxu0 0.0
        %307 = vmatpush1.msra.mxu0 0.0
        %308 = vmatprep.subr.mxu0 0.0
        %309 = vmatpush1.msra.mxu0 0.0
        %310 = vmatprep.subr.mxu0 0.0
        %311 = vmatpush1.msra.mxu0 0.0
        %312 = vmatprep.subr.mxu0 0.0
        %313 = vmatpush1.msra.mxu0 0.0
        %314 = vmatprep.subr.mxu0 0.0
        %315 = vmatpush1.msra.mxu0 0.0
        %316 = vmatprep.subr.mxu0 0.0
        %317 = vmatpush1.msra.mxu0 0.0
        %318 = vmatprep.subr.mxu0 0.0
        %319 = vmatpush1.msra.mxu0 0.0
        %320 = vmatprep.subr.mxu0 0.0
        %321 = vmatpush1.msra.mxu0 0.0
        %322 = vmatprep.subr.mxu0 0.0
        %323 = vmatpush1.msra.mxu0 0.0
        %324 = vmatprep.subr.mxu0 0.0
        %325 = vmatpush1.msra.mxu0 0.0
        %326 = vmatprep.subr.mxu0 0.0
        %327 = vmatpush1.msra.mxu0 0.0
        %328 = vmatprep.subr.mxu0 0.0
        %329 = vmatpush1.msra.mxu0 0.0
        %330 = vmatprep.subr.mxu0 0.0
        %331 = vmatpush1.msra.mxu0 0.0
        %332 = vmatprep.subr.mxu0 0.0
        %333 = vmatpush1.msra.mxu0 0.0
        %334 = vmatprep.subr.mxu0 0.0
        %335 = vmatpush1.msra.mxu0 0.0
        %336 = vmatprep.subr.mxu0 0.0
        %337 = vmatpush1.msra.mxu0 0.0
        %338 = vmatprep.subr.mxu0 0.0
        %339 = vmatpush1.msra.mxu0 0.0
        %340 = vmatprep.subr.mxu0 0.0
        %341 = vmatpush1.msra.mxu0 0.0
        %342 = vmatprep.subr.mxu0 0.0
        %343 = vmatpush1.msra.mxu0 0.0
        %344 = vmatprep.subr.mxu0 0.0
        %345 = vmatpush1.msra.mxu0 0.0
        %346 = vmatprep.subr.mxu0 0.0
        %347 = vmatpush1.msra.mxu0 0.0
        %348 = vmatprep.subr.mxu0 0.0
        %349 = vmatpush1.msra.mxu0 0.0
        %350 = vmatprep.subr.mxu0 0.0
        %351 = vmatpush1.msra.mxu0 0.0
        %352 = vmatprep.mubr.f32.mxu0 0.0
        %353 = vmatmul.mubr.f32.gmra.mrb[0].mxu0 %v283
        %v354 = vpop.f32.mrb[0].mxu0
        %v355 = vadd.f32 %v274, %v354
        %v356 = vpop.f32.mrb[0].mxu0
        %v357 = vadd.f32 %v274, %v356
        %358 = vmatprep.mubr.f32.mxu0 0.0
        %359 = vmatmul.mubr.f32.gmra.mrb[0].mxu0 %v286
        %v360 = vpop.f32.mrb[0].mxu0
        %v361 = vadd.f32 %v279, %v360
        %v362 = vpop.f32.mrb[0].mxu0
        %v363 = vadd.f32 %v279, %v362
        %364 = vdwg.mxu0
        %vm365 = vcmp.ge.f32.partialorder %v355, 0.0
        %vm366 = vcmp.ge.f32.partialorder %v357, 0.0
        %vm367 = vcmp.ge.f32.partialorder %v361, 0.0
        %vm368 = vcmp.ge.f32.partialorder %v363, 0.0
        %v369 = vmul.f32 %v355, 0.1
        %v370 = vmul.f32 %v357, 0.1
        %v371 = vmul.f32 %v361, 0.1
        %v372 = vmul.f32 %v363, 0.1
        %v373 = vsel %vm365, %v355, %v369
        %v374 = vsel %vm366, %v357, %v370
        %v375 = vsel %vm367, %v361, %v371
        %v376 = vsel %vm368, %v363, %v372
        %377 = vst [vmem:[%s247] sm:$0xff] %v373
        %378 = vst [vmem:[%s247 + $0x8] sm:$0xff] %v374
        %379 = vst [vmem:[%s247 + $0x10] sm:$0xff] %v375
        %380 = vst [vmem:[%s247 + $0x18] sm:$0xff] %v376
        %s381 = sand.u32 %s131, 1
        %s382 = scalar_lea.sflag [#allocation4], %s381
        %s383 = sand.u32 %s131, 1
        %s384 = smul.addr %s383, 32
        %s385 = scalar_lea.vmem [#allocation5], %s384
        // Predicated region
        $region37: #{tpu_custom_call.1} parent=31 // pred_check
          %p386 = pneg %p141
        $region38: #{tpu_custom_call.1} parent=31 // pred_check_branch
          %388 = sbr.rel (%p386) target = $region40
        $region39: #{tpu_custom_call.1} parent=31 // pred_region
          %s389 = smul.u32 2, %s25
          %s390 = smul.u32 2, %s27
          %s392 = ssub.s32 512, 512
          %393 = vsyncadd %s382, %s392
          %s394 = smul.addr %s389, 2
          %s395 = sadd.s32 %s390, %s394
          %s396 = smul.addr %s26, 4
          %s397 = sadd.s32 %s395, %s396
          %s398 = smul.addr %s397, 128
          %s399 = scalar_lea.hbm %s3, %s398
          %s400 = sshll.u32 %s385, 4
          %s401 = int_to_ptr.vmem [resolvable:$true] %s400
          %406 = dma.vmem_to_hbm [thread:$0]  %s401, 512, %s399, %s382, 256, 256, 16
        $region40: #{tpu_custom_call.1} parent=31 // pred_fallthru
          _
      $region32: #{tpu_custom_call.1} parent=5 // pred_fallthru
        _
      %p407 = scmp.le.s32.totalorder 2, %s15
      // Predicated region
      $region41: #{tpu_custom_call.1} parent=5 // pred_check
        %p408 = pneg %p407
      $region42: #{tpu_custom_call.1} parent=5 // pred_check_branch
        %410 = sbr.rel (%p408) target = $region44
      $region43: #{tpu_custom_call.1} parent=5 // pred_region
        %s411 = ssub.s32 %s15, 2
        // Predicated region
        $region45: #{tpu_custom_call.1} parent=43 // pred_check
          %p412 = pneg %p147
        $region46: #{tpu_custom_call.1} parent=43 // pred_check_branch
          %414 = sbr.rel (%p412) target = $region48
        $region47: #{tpu_custom_call.1} parent=43 // pred_region
          %s415 = sand.u32 %s132, 1
          %s416 = scalar_lea.sflag [#allocation4], %s415
          %s417 = sand.u32 %s132, 1
          %s418 = smul.addr %s417, 32
          %s419 = scalar_lea.vmem [#allocation5], %s418
          %420 = dma.done %s416, 512
        $region48: #{tpu_custom_call.1} parent=43 // pred_fallthru
          _
      $region44: #{tpu_custom_call.1} parent=5 // pred_fallthru
        _
    $region6: #{tpu_custom_call.1} parent=1 // loop_footer
      %s19 = sadd.s32 1, %s15
    $region7: #{tpu_custom_call.1} parent=1 // loop_footer_branch
      %14 = sbr.rel target = $region3
    $region8: #{tpu_custom_call.1} parent=1 // loop_exit
      _
    %421 = vsyncpa [#allocation3], 1
    %s422 = scalar_lea.sflag [#allocation3], 1
    %423 = vsyncpa %s422, 1
    %424 = vsyncpa [#allocation4], 1
    %s425 = scalar_lea.sflag [#allocation4], 1
    %426 = vsyncpa %s425, 1

</llo_original>
